<compile_context>
chip_gen: v7x
topology: tpu7x:2x2x1
jax: 0.10.0
libtpu: 0.0.40
codegen_flags: <defaults>
</compile_context>

<pallas_src>
import functools

import jax
import jax.numpy as jnp
from jax.experimental import pallas as pl
from jax.experimental.pallas import tpu as pltpu


def _round_up(n, m):
    return ((n + m - 1) // m) * m


def _mlp_softmax_kernel(x_ref, w1_ref, w2_ref, w3_ref, b_ref, o_ref):
    """One batch tile: 3 matmuls + ReLU + exact softmax, all resident in VMEM."""
    H = w1_ref.shape[1]
    A = w3_ref.shape[1]

    # Packed biases (f32): row 0 = b1, row 1 = b2, row 2 = b3.
    b1 = b_ref[0:1, :H]
    b2 = b_ref[1:2, :H]
    b3 = b_ref[2:3, :A]

    # Cast (if any) happens in VMEM -- no extra HBM pass in the wrapper.
    x = x_ref[...].astype(jnp.float32)

    h = jnp.dot(x, w1_ref[...], preferred_element_type=jnp.float32) + b1
    h = jnp.maximum(h, 0.0)
    h = jnp.dot(h, w2_ref[...], preferred_element_type=jnp.float32) + b2
    h = jnp.maximum(h, 0.0)
    logits = jnp.dot(h, w3_ref[...], preferred_element_type=jnp.float32) + b3

    # Numerically stable softmax over the action axis.  Exact divide: the
    # kernel is DMA-bound, so the divide is hidden behind the x DMA.
    m = jnp.max(logits, axis=-1, keepdims=True)
    e = jnp.exp(logits - m)
    denom = jnp.sum(e, axis=-1, keepdims=True)
    o_ref[...] = (e / denom).astype(o_ref.dtype)


@functools.partial(jax.jit, static_argnames=("block_b", "out_dtype", "x_buffers"))
def discrete_mlp_forward(x, params, block_b=None, out_dtype=jnp.float32,
                         x_buffers=None):
    """x: [B, D_in]. params: dict of w1,b1,w2,b2,w3,b3 (weights as [in, out]).

    Returns softmax action probabilities, shape [B, n_actions], out_dtype.
    """
    w1 = params["w1"]
    w2 = params["w2"]
    w3 = params["w3"]

    B, D_in = x.shape
    H = w1.shape[1]
    A = w3.shape[1]

    if block_b is None:
        # Big tiles amortize per-step overhead (pure HBM-streaming kernel:
        # ~96 B/row, ~3.6 kFLOP/row).  Cap at ceil(B/2) so batches with
        # >= 16 rows get >= 2 grid steps (v7x megacore shards the batch).
        # VMEM is nowhere near binding: an 8192-row f32 x tile is 512 KiB.
        block_b = min(8192, _round_up(pl.cdiv(B, 2), 8))
    block_b = max(8, _round_up(block_b, 8))   # (8, 128) sublane tiling rule

    # Ragged tail handled by Pallas boundary blocks -- no jnp.pad copy of x.
    grid = (pl.cdiv(B, block_b),)

    # Pack the three bias vectors into one f32 (8, max(H, A)) tile.
    Hmax = max(H, A)
    b_packed = jnp.zeros((8, Hmax), jnp.float32)
    b_packed = b_packed.at[0, :H].set(params["b1"].reshape(-1).astype(jnp.float32))
    b_packed = b_packed.at[1, :H].set(params["b2"].reshape(-1).astype(jnp.float32))
    b_packed = b_packed.at[2, :A].set(params["b3"].reshape(-1).astype(jnp.float32))

    if x_buffers is None:
        x_spec = pl.BlockSpec((block_b, D_in), lambda i: (i, 0))
    else:
        # Optional deeper pipelining on the dominant x stream (sweep-only).
        x_spec = pl.BlockSpec((block_b, D_in), lambda i: (i, 0),
                              pipeline_mode=pl.Buffered(x_buffers))

    grid_spec = pltpu.PrefetchScalarGridSpec(
        num_scalar_prefetch=0,
        grid=grid,
        in_specs=[
            x_spec,                                        # x tile (streamed)
            pl.BlockSpec((D_in, H), lambda i: (0, 0)),     # w1 (resident)
            pl.BlockSpec((H, H), lambda i: (0, 0)),        # w2 (resident)
            pl.BlockSpec((H, A), lambda i: (0, 0)),        # w3 (resident)
            pl.BlockSpec((8, Hmax), lambda i: (0, 0)),     # packed biases
        ],
        out_specs=pl.BlockSpec((block_b, A), lambda i: (i, 0)),
    )

    out = pl.pallas_call(
        _mlp_softmax_kernel,
        out_shape=jax.ShapeDtypeStruct((B, A), out_dtype),
        grid_spec=grid_spec,
        compiler_params=pltpu.CompilerParams(
            dimension_semantics=("parallel",)),   # batch tiles shard across TCs
    )(x, w1, w2, w3, b_packed)

    return out


def init_params(key, input_shape, policy_hidden, n_actions):
    """Deterministic synthetic params. Weights stored as [in, out]."""
    k1, k2, k3, k4, k5, k6 = jax.random.split(key, 6)

    def lin(kw, kb, fan_in, fan_out):
        # Uniform(-1/sqrt(fan_in), 1/sqrt(fan_in)), like PyTorch's default init.
        bound = 1.0 / jnp.sqrt(jnp.float32(fan_in))
        w = jax.random.uniform(kw, (fan_in, fan_out), jnp.float32,
                               minval=-bound, maxval=bound)
        b = jax.random.uniform(kb, (fan_out,), jnp.float32,
                               minval=-bound, maxval=bound)
        return w, b

    w1, b1 = lin(k1, k2, input_shape, policy_hidden)
    w2, b2 = lin(k3, k4, policy_hidden, policy_hidden)
    w3, b3 = lin(k5, k6, policy_hidden, n_actions)
    return {"w1": w1, "b1": b1, "w2": w2, "b2": b2, "w3": w3, "b3": b3}


if __name__ == "__main__":
    # Shapes consistent with the module's forward:
    #   state: [batch, input_shape[agent]] -> action probs: [batch, n_actions]
    input_shape = 16      # args.input_shape[agent]
    policy_hidden = 32    # args.policy_hidden
    n_actions = 8         # args.n_actions[agent]

    key = jax.random.PRNGKey(0)
    kx1, kx2, kp = jax.random.split(key, 3)
    params = init_params(kp, input_shape, policy_hidden, n_actions)

    # Pure-JAX f32 reference of the same math (the PyTorch module semantics).
    def ref(x, p):
        h1 = jnp.maximum(x @ p["w1"] + p["b1"], 0.0)
        h2 = jnp.maximum(h1 @ p["w2"] + p["b2"], 0.0)
        return jax.nn.softmax(h2 @ p["w3"] + p["b3"], axis=-1)

    # Run 1: default tiling.  B=64 -> block_b=32, grid=(2,), so the
    # megacore-parallel path (>= 2 "parallel" steps) is exercised.
    x1 = jax.random.normal(kx1, (64, input_shape), dtype=jnp.float32)
    out1 = jax.block_until_ready(discrete_mlp_forward(x1, params))
    exp1 = ref(x1, params)
    assert out1.shape == (64, n_actions)
    assert jnp.allclose(jnp.sum(out1, axis=-1), 1.0, atol=1e-3)   # exact divide
    assert jnp.allclose(out1, exp1, atol=1e-2)

    # Run 2: ragged batch (B=50, block_b=32) -> grid=(2,) with a partial
    # boundary block; no wrapper-side pad/copy of x.
    x2 = jax.random.normal(kx2, (50, input_shape), dtype=jnp.float32)
    out2 = jax.block_until_ready(discrete_mlp_forward(x2, params, block_b=32))
    exp2 = ref(x2, params)
    assert out2.shape == (50, n_actions)
    assert jnp.allclose(jnp.sum(out2, axis=-1), 1.0, atol=1e-3)
    assert jnp.allclose(out2, exp2, atol=1e-2)

    print("KERNEL_OK")
</pallas_src>

<mosaic_0001>
module attributes {stable_mosaic.version = 11 : i64} {
  func.func @_mlp_softmax_kernel(%arg0: i32, %arg1: memref<32x16xf32, #tpu.memory_space<vmem>>, %arg2: memref<16x32xf32, #tpu.memory_space<vmem>>, %arg3: memref<32x32xf32, #tpu.memory_space<vmem>>, %arg4: memref<32x8xf32, #tpu.memory_space<vmem>>, %arg5: memref<8x32xf32, #tpu.memory_space<vmem>>, %arg6: memref<32x8xf32, #tpu.memory_space<vmem>>) attributes {dimension_semantics = [#tpu.dimension_semantics<parallel>], iteration_bounds = array<i64: 2>, scalar_prefetch = 0 : i64, scratch_operands = 0 : i64, tpu.core_type = #tpu.core_type<tc>, window_params = [{transform_indices = @transform_0, window_bounds = array<i64: 32, 16>}, {pipeline_mode = #tpu.pipeline_mode<synchronous>, transform_indices = @transform_1, window_bounds = array<i64: 16, 32>}, {pipeline_mode = #tpu.pipeline_mode<synchronous>, transform_indices = @transform_2, window_bounds = array<i64: 32, 32>}, {pipeline_mode = #tpu.pipeline_mode<synchronous>, transform_indices = @transform_3, window_bounds = array<i64: 32, 8>}, {pipeline_mode = #tpu.pipeline_mode<synchronous>, transform_indices = @transform_4, window_bounds = array<i64: 8, 32>}, {transform_indices = @transform_5, window_bounds = array<i64: 32, 8>}]} {
    %c0 = arith.constant 0 : index
    %c0_0 = arith.constant 0 : index
    %0 = vector.load %arg5[%c0, %c0_0] : memref<8x32xf32, #tpu.memory_space<vmem>>, vector<1x32xf32>
    %c1 = arith.constant 1 : index
    %c0_1 = arith.constant 0 : index
    %1 = vector.load %arg5[%c1, %c0_1] : memref<8x32xf32, #tpu.memory_space<vmem>>, vector<1x32xf32>
    %c2 = arith.constant 2 : index
    %c0_2 = arith.constant 0 : index
    %2 = vector.load %arg5[%c2, %c0_2] : memref<8x32xf32, #tpu.memory_space<vmem>>, vector<1x8xf32>
    %c0_3 = arith.constant 0 : index
    %c0_4 = arith.constant 0 : index
    %3 = vector.load %arg1[%c0_3, %c0_4] : memref<32x16xf32, #tpu.memory_space<vmem>>, vector<32x16xf32>
    %c0_5 = arith.constant 0 : index
    %c0_6 = arith.constant 0 : index
    %4 = vector.load %arg2[%c0_5, %c0_6] : memref<16x32xf32, #tpu.memory_space<vmem>>, vector<16x32xf32>
    %cst = arith.constant dense<0.000000e+00> : vector<32x32xf32>
    %5 = tpu.matmul %3, %4, %cst {dimension_numbers = #tpu.dot_dimension_numbers<[1], [0], [0], [1], [0, 0, 1, 1], [], []>} : vector<32x16xf32>, vector<16x32xf32>, vector<32x32xf32> -> vector<32x32xf32>
    %6 = vector.broadcast %0 : vector<1x32xf32> to vector<32x32xf32>
    %7 = arith.addf %5, %6 : vector<32x32xf32>
    %cst_7 = arith.constant 0.000000e+00 : f32
    %8 = vector.broadcast %cst_7 : f32 to vector<32x32xf32>
    %9 = arith.maximumf %7, %8 : vector<32x32xf32>
    %c0_8 = arith.constant 0 : index
    %c0_9 = arith.constant 0 : index
    %10 = vector.load %arg3[%c0_8, %c0_9] : memref<32x32xf32, #tpu.memory_space<vmem>>, vector<32x32xf32>
    %cst_10 = arith.constant dense<0.000000e+00> : vector<32x32xf32>
    %11 = tpu.matmul %9, %10, %cst_10 {dimension_numbers = #tpu.dot_dimension_numbers<[1], [0], [0], [1], [0, 0, 1, 1], [], []>} : vector<32x32xf32>, vector<32x32xf32>, vector<32x32xf32> -> vector<32x32xf32>
    %12 = vector.broadcast %1 : vector<1x32xf32> to vector<32x32xf32>
    %13 = arith.addf %11, %12 : vector<32x32xf32>
    %cst_11 = arith.constant 0.000000e+00 : f32
    %14 = vector.broadcast %cst_11 : f32 to vector<32x32xf32>
    %15 = arith.maximumf %13, %14 : vector<32x32xf32>
    %c0_12 = arith.constant 0 : index
    %c0_13 = arith.constant 0 : index
    %16 = vector.load %arg4[%c0_12, %c0_13] : memref<32x8xf32, #tpu.memory_space<vmem>>, vector<32x8xf32>
    %cst_14 = arith.constant dense<0.000000e+00> : vector<32x8xf32>
    %17 = tpu.matmul %15, %16, %cst_14 {dimension_numbers = #tpu.dot_dimension_numbers<[1], [0], [0], [1], [0, 0, 1, 1], [], []>} : vector<32x32xf32>, vector<32x8xf32>, vector<32x8xf32> -> vector<32x8xf32>
    %18 = vector.broadcast %2 : vector<1x8xf32> to vector<32x8xf32>
    %19 = arith.addf %17, %18 : vector<32x8xf32>
    %cst_15 = arith.constant dense<0xFF800000> : vector<32xf32>
    %20 = vector.multi_reduction <maximumf>, %19, %cst_15 [1] : vector<32x8xf32> to vector<32xf32>
    %21 = vector.shape_cast %20 : vector<32xf32> to vector<32x1xf32>
    %22 = vector.broadcast %21 : vector<32x1xf32> to vector<32x8xf32>
    %23 = arith.subf %19, %22 : vector<32x8xf32>
    %24 = math.exp %23 : vector<32x8xf32>
    %cst_16 = arith.constant dense<0.000000e+00> : vector<32xf32>
    %25 = vector.multi_reduction <add>, %24, %cst_16 [1] : vector<32x8xf32> to vector<32xf32>
    %26 = vector.shape_cast %25 : vector<32xf32> to vector<32x1xf32>
    %27 = vector.broadcast %26 : vector<32x1xf32> to vector<32x8xf32>
    %28 = arith.divf %24, %27 : vector<32x8xf32>
    %c0_17 = arith.constant 0 : index
    %c0_18 = arith.constant 0 : index
    %29 = vector.load %arg6[%c0_17, %c0_18] : memref<32x8xf32, #tpu.memory_space<vmem>>, vector<32x8xf32>
    tpu.vector_store %arg6[%c0_17, %c0_18], %28 {strides = array<i32>} : memref<32x8xf32, #tpu.memory_space<vmem>>, vector<32x8xf32>,
    return
  }
  func.func @transform_0(%arg0: i32) -> (i32, i32) {
    %c0_i32 = arith.constant 0 : i32
    %c0_i32_0 = arith.constant 0 : i32
    return %arg0, %c0_i32 : i32, i32
  }
  func.func @transform_1(%arg0: i32) -> (i32, i32) {
    %c0_i32 = arith.constant 0 : i32
    %c0_i32_0 = arith.constant 0 : i32
    %c0_i32_1 = arith.constant 0 : i32
    return %c0_i32, %c0_i32_0 : i32, i32
  }
  func.func @transform_2(%arg0: i32) -> (i32, i32) {
    %c0_i32 = arith.constant 0 : i32
    %c0_i32_0 = arith.constant 0 : i32
    %c0_i32_1 = arith.constant 0 : i32
    return %c0_i32, %c0_i32_0 : i32, i32
  }
  func.func @transform_3(%arg0: i32) -> (i32, i32) {
    %c0_i32 = arith.constant 0 : i32
    %c0_i32_0 = arith.constant 0 : i32
    %c0_i32_1 = arith.constant 0 : i32
    return %c0_i32, %c0_i32_0 : i32, i32
  }
  func.func @transform_4(%arg0: i32) -> (i32, i32) {
    %c0_i32 = arith.constant 0 : i32
    %c0_i32_0 = arith.constant 0 : i32
    %c0_i32_1 = arith.constant 0 : i32
    return %c0_i32, %c0_i32_0 : i32, i32
  }
  func.func @transform_5(%arg0: i32) -> (i32, i32) {
    %c0_i32 = arith.constant 0 : i32
    %c0_i32_0 = arith.constant 0 : i32
    return %arg0, %c0_i32 : i32, i32
  }
}

</mosaic_0001>

<llo_original>
// kernel: discrete_mlp_forward.1
$region0: #{discrete_mlp_forward.1}
  #allocation0 [shape = 'u32[]', space=smem, size = 0x4, offset = 0x4, fixed_abs, tag = 'smem constant byte address 0x4 - core index']
  #allocation1 [shape = 'u32[144,128]{1,0:T(1,128)}', space=vmem, size = 0x12000, scoped, tag = 'internal scratch']
  %s0 = inlined_call_operand.vmem [shape: f32[64,16], index: 0, kind: input, shape index: {}]
  %s1 = inlined_call_operand.vmem [shape: f32[16,32], index: 1, kind: input, shape index: {}]
  %s2 = inlined_call_operand.vmem [shape: f32[32,32], index: 2, kind: input, shape index: {}]
  %s3 = inlined_call_operand.vmem [shape: f32[32,8], index: 3, kind: input, shape index: {}]
  %s4 = inlined_call_operand.vmem [shape: f32[8,32], index: 4, kind: input, shape index: {}]
  %s5 = inlined_call_operand.vmem [shape: f32[64,8], index: 5, kind: output, shape index: {}]
  %s6 = sld [smem:[#allocation0]]
  $region53: #{discrete_mlp_forward.1} parent=0
    _
  %s8 = ssub.s32 1, %s6
  %s9 = scalar_select 0, %s8, %s6
  loop: start=0, step=1, limit=4
  $region2: #{discrete_mlp_forward.1} parent=0 // loop_pre_header
    _
  $region3: #{discrete_mlp_forward.1} parent=0 // loop_header
    %s11 = sphi 0, %s15
    %p12 = scmp.ge.s32.totalorder %s11, 4
    %s21 = sphi 0, %s23
    %s24 = sphi 0, %s21
    %s25 = sphi 0, %s24
    %s41 = sphi 0, %s25
    %s45 = sphi 0, %s45
    %s47 = sphi 0, %s45
    %s48 = sphi 0, %s47
    %s62 = sphi 0, %s48
    %s66 = sphi 0, %s66
    %s68 = sphi 0, %s66
    %s69 = sphi 0, %s68
    %s83 = sphi 0, %s69
    %s87 = sphi 0, %s87
    %s89 = sphi 0, %s87
    %s90 = sphi 0, %s89
    %s104 = sphi 0, %s90
    %s108 = sphi 0, %s108
    %s110 = sphi 0, %s108
    %s111 = sphi 0, %s110
    %s125 = sphi 0, %s111
    %s131 = sphi 0, %s133
    %s134 = sphi 0, %s131
    %s135 = sphi 0, %s134
    %s151 = sphi 0, %s135
  $region4: #{discrete_mlp_forward.1} parent=0 // loop_header_branch
    %14 = sbr.rel (%p12) target = $region8
  $region5: #{discrete_mlp_forward.1} parent=0 // loop_body
    %s16 = ssub.s32 %s11, 1
    %s17 = ssub.s32 %s11, 2
    %s18 = sadd.s32 %s11, 1
    %s19 = ssub.s32 %s11, %s18
    %p20 = scmp.eq.s32.totalorder %s19, 0
    %s22 = sadd.s32 %s21, 1
    %s23 = scalar_select %p20, %s21, %s22
    %p26 = pneg %p20
    %p27 = scmp.eq.s32.totalorder %s11, 1
    %p28 = por %p26, %p27
    %p29 = scmp.ne.s32.totalorder %s21, %s24
    %p30 = scmp.eq.s32.totalorder %s11, 0
    %p31 = por %p29, %p30
    %p32 = scmp.ne.s32.totalorder %s21, %s24
    %p33 = scmp.eq.s32.totalorder %s16, 1
    %p34 = por %p32, %p33
    %p35 = scmp.ne.s32.totalorder %s24, %s25
    %p36 = scmp.eq.s32.totalorder %s16, 0
    %p37 = por %p35, %p36
    %p38 = scmp.ne.s32.totalorder %s24, %s25
    %p39 = scmp.eq.s32.totalorder %s17, 1
    %p40 = por %p38, %p39
    %p42 = scmp.ne.s32.totalorder %s25, %s41
    %p43 = scmp.eq.s32.totalorder %s17, 0
    %p44 = por %p42, %p43
    %s46 = sadd.s32 %s45, 1
    %p49 = scmp.eq.s32.totalorder %s11, 1
    %p50 = scmp.ne.s32.totalorder %s45, %s47
    %p51 = scmp.eq.s32.totalorder %s11, 0
    %p52 = por %p50, %p51
    %p53 = scmp.ne.s32.totalorder %s45, %s47
    %p54 = scmp.eq.s32.totalorder %s16, 1
    %p55 = por %p53, %p54
    %p56 = scmp.ne.s32.totalorder %s47, %s48
    %p57 = scmp.eq.s32.totalorder %s16, 0
    %p58 = por %p56, %p57
    %p59 = scmp.ne.s32.totalorder %s47, %s48
    %p60 = scmp.eq.s32.totalorder %s17, 1
    %p61 = por %p59, %p60
    %p63 = scmp.ne.s32.totalorder %s48, %s62
    %p64 = scmp.eq.s32.totalorder %s17, 0
    %p65 = por %p63, %p64
    %s67 = sadd.s32 %s66, 1
    %p70 = scmp.eq.s32.totalorder %s11, 1
    %p71 = scmp.ne.s32.totalorder %s66, %s68
    %p72 = scmp.eq.s32.totalorder %s11, 0
    %p73 = por %p71, %p72
    %p74 = scmp.ne.s32.totalorder %s66, %s68
    %p75 = scmp.eq.s32.totalorder %s16, 1
    %p76 = por %p74, %p75
    %p77 = scmp.ne.s32.totalorder %s68, %s69
    %p78 = scmp.eq.s32.totalorder %s16, 0
    %p79 = por %p77, %p78
    %p80 = scmp.ne.s32.totalorder %s68, %s69
    %p81 = scmp.eq.s32.totalorder %s17, 1
    %p82 = por %p80, %p81
    %p84 = scmp.ne.s32.totalorder %s69, %s83
    %p85 = scmp.eq.s32.totalorder %s17, 0
    %p86 = por %p84, %p85
    %s88 = sadd.s32 %s87, 1
    %p91 = scmp.eq.s32.totalorder %s11, 1
    %p92 = scmp.ne.s32.totalorder %s87, %s89
    %p93 = scmp.eq.s32.totalorder %s11, 0
    %p94 = por %p92, %p93
    %p95 = scmp.ne.s32.totalorder %s87, %s89
    %p96 = scmp.eq.s32.totalorder %s16, 1
    %p97 = por %p95, %p96
    %p98 = scmp.ne.s32.totalorder %s89, %s90
    %p99 = scmp.eq.s32.totalorder %s16, 0
    %p100 = por %p98, %p99
    %p101 = scmp.ne.s32.totalorder %s89, %s90
    %p102 = scmp.eq.s32.totalorder %s17, 1
    %p103 = por %p101, %p102
    %p105 = scmp.ne.s32.totalorder %s90, %s104
    %p106 = scmp.eq.s32.totalorder %s17, 0
    %p107 = por %p105, %p106
    %s109 = sadd.s32 %s108, 1
    %p112 = scmp.eq.s32.totalorder %s11, 1
    %p113 = scmp.ne.s32.totalorder %s108, %s110
    %p114 = scmp.eq.s32.totalorder %s11, 0
    %p115 = por %p113, %p114
    %p116 = scmp.ne.s32.totalorder %s108, %s110
    %p117 = scmp.eq.s32.totalorder %s16, 1
    %p118 = por %p116, %p117
    %p119 = scmp.ne.s32.totalorder %s110, %s111
    %p120 = scmp.eq.s32.totalorder %s16, 0
    %p121 = por %p119, %p120
    %p122 = scmp.ne.s32.totalorder %s110, %s111
    %p123 = scmp.eq.s32.totalorder %s17, 1
    %p124 = por %p122, %p123
    %p126 = scmp.ne.s32.totalorder %s111, %s125
    %p127 = scmp.eq.s32.totalorder %s17, 0
    %p128 = por %p126, %p127
    %s129 = ssub.s32 %s11, %s18
    %p130 = scmp.eq.s32.totalorder %s129, 0
    %s132 = sadd.s32 %s131, 1
    %s133 = scalar_select %p130, %s131, %s132
    %p136 = pneg %p130
    %p137 = scmp.eq.s32.totalorder %s11, 1
    %p138 = por %p136, %p137
    %p139 = scmp.ne.s32.totalorder %s131, %s134
    %p140 = scmp.eq.s32.totalorder %s11, 0
    %p141 = por %p139, %p140
    %p142 = scmp.ne.s32.totalorder %s131, %s134
    %p143 = scmp.eq.s32.totalorder %s16, 1
    %p144 = por %p142, %p143
    %p145 = scmp.ne.s32.totalorder %s134, %s135
    %p146 = scmp.eq.s32.totalorder %s16, 0
    %p147 = por %p145, %p146
    %p148 = scmp.ne.s32.totalorder %s134, %s135
    %p149 = scmp.eq.s32.totalorder %s17, 1
    %p150 = por %p148, %p149
    %p152 = scmp.ne.s32.totalorder %s135, %s151
    %p153 = scmp.eq.s32.totalorder %s17, 0
    %p154 = por %p152, %p153
    %p155 = scmp.le.s32.totalorder 1, %s11
    %p156 = scmp.lt.s32.totalorder %s11, 3
    %p157 = pnand %p155, %p156
    %p158 = pneg %p157
    // Predicated region
    $region9: #{discrete_mlp_forward.1} parent=5 // pred_check
      _
    $region10: #{discrete_mlp_forward.1} parent=5 // pred_check_branch
      %160 = sbr.rel (%p157) target = $region12
    $region11: #{discrete_mlp_forward.1} parent=5 // pred_region
      %s161 = ssub.s32 %s11, 1
      // Predicated region
      $region13: #{discrete_mlp_forward.1} parent=11 // pred_check
        %p162 = pneg %p58
      $region14: #{discrete_mlp_forward.1} parent=11 // pred_check_branch
        %164 = sbr.rel (%p162) target = $region16
      $region15: #{discrete_mlp_forward.1} parent=11 // pred_region
        _
      $region16: #{discrete_mlp_forward.1} parent=11 // pred_fallthru
        _
      // Predicated region
      $region17: #{discrete_mlp_forward.1} parent=11 // pred_check
        %p165 = pneg %p79
      $region18: #{discrete_mlp_forward.1} parent=11 // pred_check_branch
        %167 = sbr.rel (%p165) target = $region20
      $region19: #{discrete_mlp_forward.1} parent=11 // pred_region
        _
      $region20: #{discrete_mlp_forward.1} parent=11 // pred_fallthru
        _
      // Predicated region
      $region21: #{discrete_mlp_forward.1} parent=11 // pred_check
        %p168 = pneg %p100
      $region22: #{discrete_mlp_forward.1} parent=11 // pred_check_branch
        %170 = sbr.rel (%p168) target = $region24
      $region23: #{discrete_mlp_forward.1} parent=11 // pred_region
        _
      $region24: #{discrete_mlp_forward.1} parent=11 // pred_fallthru
        _
      // Predicated region
      $region25: #{discrete_mlp_forward.1} parent=11 // pred_check
        %p171 = pneg %p121
      $region26: #{discrete_mlp_forward.1} parent=11 // pred_check_branch
        %173 = sbr.rel (%p171) target = $region28
      $region27: #{discrete_mlp_forward.1} parent=11 // pred_region
        _
      $region28: #{discrete_mlp_forward.1} parent=11 // pred_fallthru
        _
    $region12: #{discrete_mlp_forward.1} parent=5 // pred_fallthru
      _
    %p174 = scmp.lt.s32.totalorder %s11, 2
    // Predicated region
    $region29: #{discrete_mlp_forward.1} parent=5 // pred_check
      %p175 = pneg %p174
    $region30: #{discrete_mlp_forward.1} parent=5 // pred_check_branch
      %177 = sbr.rel (%p175) target = $region32
    $region31: #{discrete_mlp_forward.1} parent=5 // pred_region
      // Predicated region
      $region33: #{discrete_mlp_forward.1} parent=31 // pred_check
        %p178 = pneg %p31
      $region34: #{discrete_mlp_forward.1} parent=31 // pred_check_branch
        %180 = sbr.rel (%p178) target = $region36
      $region35: #{discrete_mlp_forward.1} parent=31 // pred_region
        %s181 = smul.u32 4, %s11
        %p182 = scmp.lt.s32.totalorder %s181, 7
        %s183 = scalar_select %p182, %s181, 7
        %s184 = smul.addr %s183, 8
        %s185 = scalar_lea.vmem %s0, %s184
        %s186 = smul.u32 4, %s11
      $region36: #{discrete_mlp_forward.1} parent=31 // pred_fallthru
        _
    $region32: #{discrete_mlp_forward.1} parent=5 // pred_fallthru
      _
    %p187 = scmp.le.s32.totalorder 1, %s11
    %p188 = scmp.lt.s32.totalorder %s11, 3
    %p189 = pnand %p187, %p188
    %p190 = pneg %p189
    // Predicated region
    $region37: #{discrete_mlp_forward.1} parent=5 // pred_check
      _
    $region38: #{discrete_mlp_forward.1} parent=5 // pred_check_branch
      %192 = sbr.rel (%p189) target = $region40
    $region39: #{discrete_mlp_forward.1} parent=5 // pred_region
      %s193 = ssub.s32 %s11, 1
      %s194 = smul.u32 4, %s16
      %p195 = scmp.lt.s32.totalorder %s194, 7
      %s196 = scalar_select %p195, %s194, 7
      %s197 = smul.addr %s196, 8
      %s198 = scalar_lea.vmem %s0, %s197
      %p199 = pneg %p37
      %p200 = pneg %p34
      %p201 = pneg %p58
      %p202 = pneg %p55
      %p203 = pneg %p79
      %p204 = pneg %p76
      %p205 = pneg %p100
      %p206 = pneg %p97
      %p207 = pneg %p121
      %p208 = pneg %p118
      %p209 = pneg %p147
      %p210 = pneg %p144
      %s211 = smul.u32 4, %s16
      %p212 = scmp.lt.s32.totalorder %s211, 7
      %s213 = scalar_select %p212, %s211, 7
      %s214 = smul.addr %s213, 8
      %s215 = scalar_lea.vmem %s5, %s214
      %s216 = smul.u32 4, %s16
      %p217 = scmp.lt.s32.totalorder %s216, 7
      %s218 = scalar_select %p217, %s216, 7
      %s219 = smul.addr %s218, 8
      %s220 = scalar_lea.vmem %s0, %s219
      %s221 = smul.u32 4, %s16
      %s222 = smul.u32 4, %s16
      %p223 = scmp.lt.s32.totalorder %s222, 7
      %s224 = scalar_select %p223, %s222, 7
      %s225 = smul.addr %s224, 8
      %s226 = scalar_lea.vmem %s5, %s225
      %s227 = smul.u32 4, %s16
      %v228 = vld [vmem:[%s4] sm:$0x1]
      %v229 = vld [vmem:[%s4 + $0x1] sm:$0x1]
      %v230 = vld [vmem:[%s4 + $0x2] sm:$0x1]
      %v231 = vld [vmem:[%s220] sm:$0xff]
      %v232 = vld [vmem:[%s220 + $0x8] sm:$0xff]
      %v233 = vld [vmem:[%s220 + $0x10] sm:$0xff]
      %v234 = vld [vmem:[%s220 + $0x18] sm:$0xff]
      %v235 = vld [vmem:[%s1] sm:$0xff]
      %v236 = vld [vmem:[%s1 + $0x8] sm:$0xff]
      %v237 = vlaneseq
      %v238 = vshrl.u32 %v237, 7
      %v239 = vsub.s32 0, %v238
      %v240 = vrot.slane %v228, %v239
      %vm241 = vcmask 130048
      %v243 = vsel %vm241, %v231, 0
      %v246 = vsel %vm241, %v232, 0
      %v249 = vsel %vm241, %v233, 0
      %v252 = vsel %vm241, %v234, 0
      %254 = vmatprep.subr.mxu0 0.0
      %255 = vmatpush1.msra.mxu0 %v235
      %256 = vmatprep.subr.mxu0 0.0
      %257 = vmatpush1.msra.mxu0 %v236
      %258 = vmatprep.subr.mxu0 0.0
      %259 = vmatpush1.msra.mxu0 0.0
      %260 = vmatprep.subr.mxu0 0.0
      %261 = vmatpush1.msra.mxu0 0.0
      %262 = vmatprep.subr.mxu0 0.0
      %263 = vmatpush1.msra.mxu0 0.0
      %264 = vmatprep.subr.mxu0 0.0
      %265 = vmatpush1.msra.mxu0 0.0
      %266 = vmatprep.subr.mxu0 0.0
      %267 = vmatpush1.msra.mxu0 0.0
      %268 = vmatprep.subr.mxu0 0.0
      %269 = vmatpush1.msra.mxu0 0.0
      %270 = vmatprep.subr.mxu0 0.0
      %271 = vmatpush1.msra.mxu0 0.0
      %272 = vmatprep.subr.mxu0 0.0
      %273 = vmatpush1.msra.mxu0 0.0
      %274 = vmatprep.subr.mxu0 0.0
      %275 = vmatpush1.msra.mxu0 0.0
      %276 = vmatprep.subr.mxu0 0.0
      %277 = vmatpush1.msra.mxu0 0.0
      %278 = vmatprep.subr.mxu0 0.0
      %279 = vmatpush1.msra.mxu0 0.0
      %280 = vmatprep.subr.mxu0 0.0
      %281 = vmatpush1.msra.mxu0 0.0
      %282 = vmatprep.subr.mxu0 0.0
      %283 = vmatpush1.msra.mxu0 0.0
      %284 = vmatprep.subr.mxu0 0.0
      %285 = vmatpush1.msra.mxu0 0.0
      %286 = vmatprep.subr.mxu0 0.0
      %287 = vmatpush1.msra.mxu0 0.0
      %288 = vmatprep.subr.mxu0 0.0
      %289 = vmatpush1.msra.mxu0 0.0
      %290 = vmatprep.subr.mxu0 0.0
      %291 = vmatpush1.msra.mxu0 0.0
      %292 = vmatprep.subr.mxu0 0.0
      %293 = vmatpush1.msra.mxu0 0.0
      %294 = vmatprep.subr.mxu0 0.0
      %295 = vmatpush1.msra.mxu0 0.0
      %296 = vmatprep.subr.mxu0 0.0
      %297 = vmatpush1.msra.mxu0 0.0
      %298 = vmatprep.subr.mxu0 0.0
      %299 = vmatpush1.msra.mxu0 0.0
      %300 = vmatprep.subr.mxu0 0.0
      %301 = vmatpush1.msra.mxu0 0.0
      %302 = vmatprep.subr.mxu0 0.0
      %303 = vmatpush1.msra.mxu0 0.0
      %304 = vmatprep.subr.mxu0 0.0
      %305 = vmatpush1.msra.mxu0 0.0
      %306 = vmatprep.subr.mxu0 0.0
      %307 = vmatpush1.msra.mxu0 0.0
      %308 = vmatprep.subr.mxu0 0.0
      %309 = vmatpush1.msra.mxu0 0.0
      %310 = vmatprep.subr.mxu0 0.0
      %311 = vmatpush1.msra.mxu0 0.0
      %312 = vmatprep.subr.mxu0 0.0
      %313 = vmatpush1.msra.mxu0 0.0
      %314 = vmatprep.subr.mxu0 0.0
      %315 = vmatpush1.msra.mxu0 0.0
      %316 = vmatprep.subr.mxu0 0.0
      %317 = vmatpush1.msra.mxu0 0.0
      %318 = vmatprep.mubr.f32.mxu0 0.0
      %319 = vmatmul.mubr.f32.gmra.mrb[0].mxu0 %v243
      %v320 = vpop.f32.mrb[0].mxu0
      %v321 = vadd.f32 %v240, %v320
      %v322 = vpop.f32.mrb[0].mxu0
      %323 = vmatprep.mubr.f32.mxu0 0.0
      %324 = vmatmul.mubr.f32.gmra.mrb[0].mxu0 %v246
      %v325 = vpop.f32.mrb[0].mxu0
      %v326 = vadd.f32 %v240, %v325
      %v327 = vpop.f32.mrb[0].mxu0
      %328 = vmatprep.mubr.f32.mxu0 0.0
      %329 = vmatmul.mubr.f32.gmra.mrb[0].mxu0 %v249
      %v330 = vpop.f32.mrb[0].mxu0
      %v331 = vadd.f32 %v240, %v330
      %v332 = vpop.f32.mrb[0].mxu0
      %333 = vmatprep.mubr.f32.mxu0 0.0
      %334 = vmatmul.mubr.f32.gmra.mrb[0].mxu0 %v252
      %v335 = vpop.f32.mrb[0].mxu0
      %v336 = vadd.f32 %v240, %v335
      %v337 = vpop.f32.mrb[0].mxu0
      %338 = vdwg.mxu0
      %v339 = vmax.f32 %v321, 0.0
      %v340 = vmax.f32 %v326, 0.0
      %v341 = vmax.f32 %v331, 0.0
      %v342 = vmax.f32 %v336, 0.0
      %v343 = vld [vmem:[%s2] sm:$0xff]
      %v344 = vld [vmem:[%s2 + $0x8] sm:$0xff]
      %v345 = vld [vmem:[%s2 + $0x10] sm:$0xff]
      %v346 = vld [vmem:[%s2 + $0x18] sm:$0xff]
      %v347 = vlaneseq
      %v348 = vshrl.u32 %v347, 7
      %v349 = vsub.s32 0, %v348
      %v350 = vrot.slane %v229, %v349
      %vm351 = vcmask 261120
      %v353 = vsel %vm351, %v339, 0
      %v356 = vsel %vm351, %v340, 0
      %v359 = vsel %vm351, %v341, 0
      %v362 = vsel %vm351, %v342, 0
      %364 = vmatprep.subr.mxu0 0.0
      %365 = vmatpush1.msra.mxu0 %v343
      %366 = vmatprep.subr.mxu0 0.0
      %367 = vmatpush1.msra.mxu0 %v344
      %368 = vmatprep.subr.mxu0 0.0
      %369 = vmatpush1.msra.mxu0 %v345
      %370 = vmatprep.subr.mxu0 0.0
      %371 = vmatpush1.msra.mxu0 %v346
      %372 = vmatprep.subr.mxu0 0.0
      %373 = vmatpush1.msra.mxu0 0.0
      %374 = vmatprep.subr.mxu0 0.0
      %375 = vmatpush1.msra.mxu0 0.0
      %376 = vmatprep.subr.mxu0 0.0
      %377 = vmatpush1.msra.mxu0 0.0
      %378 = vmatprep.subr.mxu0 0.0
      %379 = vmatpush1.msra.mxu0 0.0
      %380 = vmatprep.subr.mxu0 0.0
      %381 = vmatpush1.msra.mxu0 0.0
      %382 = vmatprep.subr.mxu0 0.0
      %383 = vmatpush1.msra.mxu0 0.0
      %384 = vmatprep.subr.mxu0 0.0
      %385 = vmatpush1.msra.mxu0 0.0
      %386 = vmatprep.subr.mxu0 0.0
      %387 = vmatpush1.msra.mxu0 0.0
      %388 = vmatprep.subr.mxu0 0.0
      %389 = vmatpush1.msra.mxu0 0.0
      %390 = vmatprep.subr.mxu0 0.0
      %391 = vmatpush1.msra.mxu0 0.0
      %392 = vmatprep.subr.mxu0 0.0
      %393 = vmatpush1.msra.mxu0 0.0
      %394 = vmatprep.subr.mxu0 0.0
      %395 = vmatpush1.msra.mxu0 0.0
      %396 = vmatprep.subr.mxu0 0.0
      %397 = vmatpush1.msra.mxu0 0.0
      %398 = vmatprep.subr.mxu0 0.0
      %399 = vmatpush1.msra.mxu0 0.0
      %400 = vmatprep.subr.mxu0 0.0
      %401 = vmatpush1.msra.mxu0 0.0
      %402 = vmatprep.subr.mxu0 0.0
      %403 = vmatpush1.msra.mxu0 0.0
      %404 = vmatprep.subr.mxu0 0.0
      %405 = vmatpush1.msra.mxu0 0.0
      %406 = vmatprep.subr.mxu0 0.0
      %407 = vmatpush1.msra.mxu0 0.0
      %408 = vmatprep.subr.mxu0 0.0
      %409 = vmatpush1.msra.mxu0 0.0
      %410 = vmatprep.subr.mxu0 0.0
      %411 = vmatpush1.msra.mxu0 0.0
      %412 = vmatprep.subr.mxu0 0.0
      %413 = vmatpush1.msra.mxu0 0.0
      %414 = vmatprep.subr.mxu0 0.0
      %415 = vmatpush1.msra.mxu0 0.0
      %416 = vmatprep.subr.mxu0 0.0
      %417 = vmatpush1.msra.mxu0 0.0
      %418 = vmatprep.subr.mxu0 0.0
      %419 = vmatpush1.msra.mxu0 0.0
      %420 = vmatprep.subr.mxu0 0.0
      %421 = vmatpush1.msra.mxu0 0.0
      %422 = vmatprep.subr.mxu0 0.0
      %423 = vmatpush1.msra.mxu0 0.0
      %424 = vmatprep.subr.mxu0 0.0
      %425 = vmatpush1.msra.mxu0 0.0
      %426 = vmatprep.subr.mxu0 0.0
      %427 = vmatpush1.msra.mxu0 0.0
      %428 = vmatprep.mubr.f32.mxu0 0.0
      %429 = vmatmul.mubr.f32.gmra.mrb[0].mxu0 %v353
      %v430 = vpop.f32.mrb[0].mxu0
      %v431 = vadd.f32 %v350, %v430
      %v432 = vpop.f32.mrb[0].mxu0
      %433 = vmatprep.mubr.f32.mxu0 0.0
      %434 = vmatmul.mubr.f32.gmra.mrb[0].mxu0 %v356
      %v435 = vpop.f32.mrb[0].mxu0
      %v436 = vadd.f32 %v350, %v435
      %v437 = vpop.f32.mrb[0].mxu0
      %438 = vmatprep.mubr.f32.mxu0 0.0
      %439 = vmatmul.mubr.f32.gmra.mrb[0].mxu0 %v359
      %v440 = vpop.f32.mrb[0].mxu0
      %v441 = vadd.f32 %v350, %v440
      %v442 = vpop.f32.mrb[0].mxu0
      %443 = vmatprep.mubr.f32.mxu0 0.0
      %444 = vmatmul.mubr.f32.gmra.mrb[0].mxu0 %v362
      %v445 = vpop.f32.mrb[0].mxu0
      %v446 = vadd.f32 %v350, %v445
      %v447 = vpop.f32.mrb[0].mxu0
      %448 = vdwg.mxu0
      %v449 = vmax.f32 %v431, 0.0
      %v450 = vmax.f32 %v436, 0.0
      %v451 = vmax.f32 %v441, 0.0
      %v452 = vmax.f32 %v446, 0.0
      %v453 = vld [vmem:[%s3] sm:$0xff]
      %v454 = vld [vmem:[%s3 + $0x8] sm:$0xff]
      %v455 = vld [vmem:[%s3 + $0x10] sm:$0xff]
      %v456 = vld [vmem:[%s3 + $0x18] sm:$0xff]
      %v457 = vlaneseq
      %v458 = vshrl.u32 %v457, 7
      %v459 = vsub.s32 0, %v458
      %v460 = vrot.slane %v230, %v459
      %v462 = vsel %vm351, %v449, 0
      %v465 = vsel %vm351, %v450, 0
      %v468 = vsel %vm351, %v451, 0
      %v471 = vsel %vm351, %v452, 0
      %473 = vmatprep.subr.mxu0 0.0
      %474 = vmatpush1.msra.mxu0 %v453
      %475 = vmatprep.subr.mxu0 0.0
      %476 = vmatpush1.msra.mxu0 %v454
      %477 = vmatprep.subr.mxu0 0.0
      %478 = vmatpush1.msra.mxu0 %v455
      %479 = vmatprep.subr.mxu0 0.0
      %480 = vmatpush1.msra.mxu0 %v456
      %481 = vmatprep.subr.mxu0 0.0
      %482 = vmatpush1.msra.mxu0 0.0
      %483 = vmatprep.subr.mxu0 0.0
      %484 = vmatpush1.msra.mxu0 0.0
      %485 = vmatprep.subr.mxu0 0.0
      %486 = vmatpush1.msra.mxu0 0.0
      %487 = vmatprep.subr.mxu0 0.0
      %488 = vmatpush1.msra.mxu0 0.0
      %489 = vmatprep.subr.mxu0 0.0
      %490 = vmatpush1.msra.mxu0 0.0
      %491 = vmatprep.subr.mxu0 0.0
      %492 = vmatpush1.msra.mxu0 0.0
      %493 = vmatprep.subr.mxu0 0.0
      %494 = vmatpush1.msra.mxu0 0.0
      %495 = vmatprep.subr.mxu0 0.0
      %496 = vmatpush1.msra.mxu0 0.0
      %497 = vmatprep.subr.mxu0 0.0
      %498 = vmatpush1.msra.mxu0 0.0
      %499 = vmatprep.subr.mxu0 0.0
      %500 = vmatpush1.msra.mxu0 0.0
      %501 = vmatprep.subr.mxu0 0.0
      %502 = vmatpush1.msra.mxu0 0.0
      %503 = vmatprep.subr.mxu0 0.0
      %504 = vmatpush1.msra.mxu0 0.0
      %505 = vmatprep.subr.mxu0 0.0
      %506 = vmatpush1.msra.mxu0 0.0
      %507 = vmatprep.subr.mxu0 0.0
      %508 = vmatpush1.msra.mxu0 0.0
      %509 = vmatprep.subr.mxu0 0.0
      %510 = vmatpush1.msra.mxu0 0.0
      %511 = vmatprep.subr.mxu0 0.0
      %512 = vmatpush1.msra.mxu0 0.0
      %513 = vmatprep.subr.mxu0 0.0
      %514 = vmatpush1.msra.mxu0 0.0
      %515 = vmatprep.subr.mxu0 0.0
      %516 = vmatpush1.msra.mxu0 0.0
      %517 = vmatprep.subr.mxu0 0.0
      %518 = vmatpush1.msra.mxu0 0.0
      %519 = vmatprep.subr.mxu0 0.0
      %520 = vmatpush1.msra.mxu0 0.0
      %521 = vmatprep.subr.mxu0 0.0
      %522 = vmatpush1.msra.mxu0 0.0
      %523 = vmatprep.subr.mxu0 0.0
      %524 = vmatpush1.msra.mxu0 0.0
      %525 = vmatprep.subr.mxu0 0.0
      %526 = vmatpush1.msra.mxu0 0.0
      %527 = vmatprep.subr.mxu0 0.0
      %528 = vmatpush1.msra.mxu0 0.0
      %529 = vmatprep.subr.mxu0 0.0
      %530 = vmatpush1.msra.mxu0 0.0
      %531 = vmatprep.subr.mxu0 0.0
      %532 = vmatpush1.msra.mxu0 0.0
      %533 = vmatprep.subr.mxu0 0.0
      %534 = vmatpush1.msra.mxu0 0.0
      %535 = vmatprep.subr.mxu0 0.0
      %536 = vmatpush1.msra.mxu0 0.0
      %537 = vmatprep.mubr.f32.mxu0 0.0
      %538 = vmatmul.mubr.f32.gmra.mrb[0].mxu0 %v462
      %v539 = vpop.f32.mrb[0].mxu0
      %v540 = vadd.f32 %v460, %v539
      %v541 = vpop.f32.mrb[0].mxu0
      %542 = vmatprep.mubr.f32.mxu0 0.0
      %543 = vmatmul.mubr.f32.gmra.mrb[0].mxu0 %v465
      %v544 = vpop.f32.mrb[0].mxu0
      %v545 = vadd.f32 %v460, %v544
      %v546 = vpop.f32.mrb[0].mxu0
      %547 = vmatprep.mubr.f32.mxu0 0.0
      %548 = vmatmul.mubr.f32.gmra.mrb[0].mxu0 %v468
      %v549 = vpop.f32.mrb[0].mxu0
      %v550 = vadd.f32 %v460, %v549
      %v551 = vpop.f32.mrb[0].mxu0
      %552 = vmatprep.mubr.f32.mxu0 0.0
      %553 = vmatmul.mubr.f32.gmra.mrb[0].mxu0 %v471
      %v554 = vpop.f32.mrb[0].mxu0
      %v555 = vadd.f32 %v460, %v554
      %v556 = vpop.f32.mrb[0].mxu0
      %557 = vdwg.mxu0
      %vm558 = vcmask 64512
      %v559 = vsel %vm558, %v540, -inf
      %560 = vmax.xlane.f32.xlu0 %v559
      %v561 = vpop.xlane.xlu0 %560
      %v562 = vsel %vm558, %v545, -inf
      %563 = vmax.xlane.f32.xlu0 %v562
      %v564 = vpop.xlane.xlu0 %563
      %v565 = vsel %vm558, %v550, -inf
      %566 = vmax.xlane.f32.xlu0 %v565
      %v567 = vpop.xlane.xlu0 %566
      %v568 = vsel %vm558, %v555, -inf
      %569 = vmax.xlane.f32.xlu0 %v568
      %v570 = vpop.xlane.xlu0 %569
      %v571 = vsub.f32 %v540, %v561
      %v572 = vsub.f32 %v545, %v564
      %v573 = vsub.f32 %v550, %v567
      %v574 = vsub.f32 %v555, %v570
      %v575 = vmul.f32 %v571, 1.442695
      %v576 = vpow.pop %v575
      %v577 = vmul.f32 %v572, 1.442695
      %v578 = vpow.pop %v577
      %v579 = vmul.f32 %v573, 1.442695
      %v580 = vpow.pop %v579
      %v581 = vmul.f32 %v574, 1.442695
      %v582 = vpow.pop %v581
      %v583 = vsel %vm558, %v576, 0.0
      %584 = vadd.xlane.f32.xlu0 %v583
      %v585 = vpop.xlane.xlu0 %584
      %v586 = vsel %vm558, %v578, 0.0
      %587 = vadd.xlane.f32.xlu0 %v586
      %v588 = vpop.xlane.xlu0 %587
      %v589 = vsel %vm558, %v580, 0.0
      %590 = vadd.xlane.f32.xlu0 %v589
      %v591 = vpop.xlane.xlu0 %590
      %v592 = vsel %vm558, %v582, 0.0
      %593 = vadd.xlane.f32.xlu0 %v592
      %v594 = vpop.xlane.xlu0 %593
      %v595 = vrcp.pop %v585
      %v596 = vmul.f32 %v576, %v595
      %v597 = vrcp.pop %v588
      %v598 = vmul.f32 %v578, %v597
      %v599 = vrcp.pop %v591
      %v600 = vmul.f32 %v580, %v599
      %v601 = vrcp.pop %v594
      %v602 = vmul.f32 %v582, %v601
      %603 = vst.msk [vmem:[%s226] sm:$0xff] %vm558, %v596
      %604 = vst.msk [vmem:[%s226 + $0x8] sm:$0xff] %vm558, %v598
      %605 = vst.msk [vmem:[%s226 + $0x10] sm:$0xff] %vm558, %v600
      %606 = vst.msk [vmem:[%s226 + $0x18] sm:$0xff] %vm558, %v602
      %s607 = smul.u32 4, %s16
      %p608 = scmp.lt.s32.totalorder %s607, 7
      %s609 = scalar_select %p608, %s607, 7
      %s610 = smul.addr %s609, 8
      %s611 = scalar_lea.vmem %s5, %s610
      // Predicated region
      $region41: #{discrete_mlp_forward.1} parent=39 // pred_check
        %p612 = pneg %p144
      $region42: #{discrete_mlp_forward.1} parent=39 // pred_check_branch
        %614 = sbr.rel (%p612) target = $region44
      $region43: #{discrete_mlp_forward.1} parent=39 // pred_region
        %s615 = smul.u32 4, %s16
      $region44: #{discrete_mlp_forward.1} parent=39 // pred_fallthru
        _
    $region40: #{discrete_mlp_forward.1} parent=5 // pred_fallthru
      _
    %p616 = scmp.le.s32.totalorder 2, %s11
    // Predicated region
    $region45: #{discrete_mlp_forward.1} parent=5 // pred_check
      %p617 = pneg %p616
    $region46: #{discrete_mlp_forward.1} parent=5 // pred_check_branch
      %619 = sbr.rel (%p617) target = $region48
    $region47: #{discrete_mlp_forward.1} parent=5 // pred_region
      %s620 = ssub.s32 %s11, 2
      // Predicated region
      $region49: #{discrete_mlp_forward.1} parent=47 // pred_check
        %p621 = pneg %p150
      $region50: #{discrete_mlp_forward.1} parent=47 // pred_check_branch
        %623 = sbr.rel (%p621) target = $region52
      $region51: #{discrete_mlp_forward.1} parent=47 // pred_region
        %s624 = smul.u32 4, %s17
        %p625 = scmp.lt.s32.totalorder %s624, 7
        %s626 = scalar_select %p625, %s624, 7
        %s627 = smul.addr %s626, 8
        %s628 = scalar_lea.vmem %s5, %s627
      $region52: #{discrete_mlp_forward.1} parent=47 // pred_fallthru
        _
    $region48: #{discrete_mlp_forward.1} parent=5 // pred_fallthru
      _
  $region6: #{discrete_mlp_forward.1} parent=0 // loop_footer
    %s15 = sadd.s32 1, %s11
  $region7: #{discrete_mlp_forward.1} parent=0 // loop_footer_branch
    %10 = sbr.rel target = $region3
  $region8: #{discrete_mlp_forward.1} parent=0 // loop_exit
    _

</llo_original>
